<compile_context>
chip_gen: v7x
topology: tpu7x:2x2x1
jax: 0.10.0
libtpu: 0.0.40
codegen_flags: <defaults>
</compile_context>

<pallas_src>
import jax
import jax.numpy as jnp
from jax.experimental import pallas as pl
from jax.experimental.pallas import tpu as pltpu


def _actnorm_fwd_kernel(x_ref, bias_ref, scale_ref, out_ref):
    # forward: out = (x + bias) * exp(logs);  bias/scale are (r_tile, 1), lane-broadcast.
    out_ref[...] = ((x_ref[...] + bias_ref[...]) * scale_ref[...]).astype(out_ref.dtype)


def _actnorm_rev_kernel(x_ref, bias_ref, inv_scale_ref, out_ref):
    # reverse: out = x * exp(-logs) - bias
    out_ref[...] = (x_ref[...] * inv_scale_ref[...] - bias_ref[...]).astype(out_ref.dtype)


def actnorm(x, bias, logs, logdet=0.0, reverse=False):
    """x: (N, C, H, W); bias, logs: (1, C, 1, 1). Returns (out NCHW, logdet scalar)."""
    N, C, H, W = x.shape
    hw = H * W
    R = N * C

    bias_c = bias.reshape(C).astype(jnp.float32)
    logs_c = logs.reshape(C).astype(jnp.float32)

    # Per-channel params, precomputed in the wrapper (tiny; not the big input).
    if not reverse:
        scale_c = jnp.exp(logs_c)
        dlogdet = jnp.sum(logs_c) * hw
    else:
        scale_c = jnp.exp(-logs_c)
        dlogdet = -jnp.sum(logs_c) * hw

    # 2D slab layout: rows = N*C (sublanes), cols = H*W (lanes).
    x2 = x.reshape(R, hw)
    bias2 = jnp.tile(bias_c, N).reshape(R, 1)
    scale2 = jnp.tile(scale_c, N).reshape(R, 1)

    # Tile selection: full dim if small (block_shape == full dim is always legal),
    # otherwise multiples of 8 (sublane) / 128 (lane). ~1 MiB f32 per x buffer max,
    # well within scoped VMEM even on v7x with double-buffered in+out.
    r_tile = R if R <= 512 else 256
    hw_tile = hw if hw <= 2048 else 1024

    grid = (pl.cdiv(R, r_tile), pl.cdiv(hw, hw_tile))

    kernel = _actnorm_rev_kernel if reverse else _actnorm_fwd_kernel

    out2 = pl.pallas_call(
        kernel,
        out_shape=jax.ShapeDtypeStruct((R, hw), x.dtype),
        grid_spec=pltpu.PrefetchScalarGridSpec(
            num_scalar_prefetch=0,
            grid=grid,
            in_specs=[
                pl.BlockSpec((r_tile, hw_tile), lambda i, j: (i, j)),  # x tile
                pl.BlockSpec((r_tile, 1), lambda i, j: (i, 0)),        # per-row bias
                pl.BlockSpec((r_tile, 1), lambda i, j: (i, 0)),        # per-row scale
            ],
            out_specs=pl.BlockSpec((r_tile, hw_tile), lambda i, j: (i, j)),
        ),
        compiler_params=pltpu.CompilerParams(
            dimension_semantics=("parallel", "parallel"),
            vmem_limit_bytes=64 << 20,
        ),
    )(x2, bias2, scale2)

    out = out2.reshape(N, C, H, W)
    return out, logdet + dlogdet


def _actnorm_ref(x, bias, logs, logdet=0.0, reverse=False):
    """Pure-JAX reference matching the PyTorch module exactly."""
    hw = x.shape[2] * x.shape[3]
    if not reverse:
        out = (x + bias) * jnp.exp(logs)
        dlogdet = jnp.sum(logs) * hw
    else:
        out = x * jnp.exp(-logs) - bias
        dlogdet = -jnp.sum(logs) * hw
    return out, logdet + dlogdet


if __name__ == "__main__":
    N, C, H, W = 2, 4, 16, 16

    key = jax.random.PRNGKey(0)
    kb, kl, kx = jax.random.split(key, 3)

    # Deterministic parameter init matching the module: Normal(0, 0.05), shape (1, C, 1, 1)
    bias = 0.05 * jax.random.normal(kb, (1, C, 1, 1), dtype=jnp.float32)
    logs = 0.05 * jax.random.normal(kl, (1, C, 1, 1), dtype=jnp.float32)
    x = jax.random.normal(kx, (N, C, H, W), dtype=jnp.float32)

    # Forward (reverse=False)
    out, logdet = actnorm(x, bias, logs, logdet=0.0, reverse=False)
    jax.block_until_ready(out)
    jax.block_until_ready(logdet)

    out_ref, logdet_ref = _actnorm_ref(x, bias, logs, logdet=0.0, reverse=False)
    assert jnp.allclose(out, out_ref, atol=1e-5, rtol=1e-5)
    assert jnp.allclose(logdet, logdet_ref, atol=1e-5, rtol=1e-5)

    # Reverse (should invert the forward pass)
    x_rec, logdet_rt = actnorm(out, bias, logs, logdet=logdet, reverse=True)
    jax.block_until_ready(x_rec)
    assert jnp.allclose(x_rec, x, atol=1e-5, rtol=1e-5)
    assert jnp.allclose(logdet_rt, 0.0, atol=1e-5)

    print("KERNEL_OK")
</pallas_src>

<mosaic_0001>
module attributes {stable_mosaic.version = 11 : i64} {
  func.func @_actnorm_fwd_kernel(%arg0: i32, %arg1: i32, %arg2: memref<8x256xf32, #tpu.memory_space<vmem>>, %arg3: memref<8x1xf32, #tpu.memory_space<vmem>>, %arg4: memref<8x1xf32, #tpu.memory_space<vmem>>, %arg5: memref<8x256xf32, #tpu.memory_space<vmem>>) attributes {dimension_semantics = [#tpu.dimension_semantics<parallel>, #tpu.dimension_semantics<parallel>], iteration_bounds = array<i64: 1, 1>, scalar_prefetch = 0 : i64, scratch_operands = 0 : i64, tpu.core_type = #tpu.core_type<tc>, window_params = [{transform_indices = @transform_0, window_bounds = array<i64: 8, 256>}, {transform_indices = @transform_1, window_bounds = array<i64: 8, 1>}, {transform_indices = @transform_2, window_bounds = array<i64: 8, 1>}, {transform_indices = @transform_3, window_bounds = array<i64: 8, 256>}]} {
    %c0 = arith.constant 0 : index
    %c0_0 = arith.constant 0 : index
    %0 = vector.load %arg2[%c0, %c0_0] : memref<8x256xf32, #tpu.memory_space<vmem>>, vector<8x256xf32>
    %c0_1 = arith.constant 0 : index
    %c0_2 = arith.constant 0 : index
    %1 = vector.load %arg3[%c0_1, %c0_2] : memref<8x1xf32, #tpu.memory_space<vmem>>, vector<8x1xf32>
    %2 = vector.broadcast %1 : vector<8x1xf32> to vector<8x256xf32>
    %3 = arith.addf %0, %2 : vector<8x256xf32>
    %c0_3 = arith.constant 0 : index
    %c0_4 = arith.constant 0 : index
    %4 = vector.load %arg4[%c0_3, %c0_4] : memref<8x1xf32, #tpu.memory_space<vmem>>, vector<8x1xf32>
    %5 = vector.broadcast %4 : vector<8x1xf32> to vector<8x256xf32>
    %6 = arith.mulf %3, %5 : vector<8x256xf32>
    %c0_5 = arith.constant 0 : index
    %c0_6 = arith.constant 0 : index
    %7 = vector.load %arg5[%c0_5, %c0_6] : memref<8x256xf32, #tpu.memory_space<vmem>>, vector<8x256xf32>
    tpu.vector_store %arg5[%c0_5, %c0_6], %6 {strides = array<i32>} : memref<8x256xf32, #tpu.memory_space<vmem>>, vector<8x256xf32>,
    return
  }
  func.func @transform_0(%arg0: i32, %arg1: i32) -> (i32, i32) {
    %c0_i32 = arith.constant 0 : i32
    return %arg0, %arg1 : i32, i32
  }
  func.func @transform_1(%arg0: i32, %arg1: i32) -> (i32, i32) {
    %c0_i32 = arith.constant 0 : i32
    %c0_i32_0 = arith.constant 0 : i32
    return %arg0, %c0_i32 : i32, i32
  }
  func.func @transform_2(%arg0: i32, %arg1: i32) -> (i32, i32) {
    %c0_i32 = arith.constant 0 : i32
    %c0_i32_0 = arith.constant 0 : i32
    return %arg0, %c0_i32 : i32, i32
  }
  func.func @transform_3(%arg0: i32, %arg1: i32) -> (i32, i32) {
    %c0_i32 = arith.constant 0 : i32
    return %arg0, %arg1 : i32, i32
  }
}

</mosaic_0001>

<llo_original>
// kernel: tpu_custom_call.1
$region0: #{tpu_custom_call.1}
  #allocation0 [shape = 'u32[]', space=smem, size = 0x4, offset = 0x4, fixed_abs, tag = 'smem constant byte address 0x4 - core index']
  #allocation1 [shape = 'u32[144,128]{1,0:T(1,128)}', space=vmem, size = 0x12000, scoped, tag = 'internal scratch']
  %s0 = inlined_call_operand.hbm [shape: f32[8,256], index: 0, kind: input, shape index: {}]
  %s1 = inlined_call_operand.hbm [shape: f32[8,1], index: 1, kind: input, shape index: {}]
  %s2 = inlined_call_operand.hbm [shape: f32[8,1], index: 2, kind: input, shape index: {}]
  %s3 = inlined_call_operand.hbm [shape: f32[8,256], index: 3, kind: output, shape index: {}]
  %s4 = sld [smem:[#allocation0]]
  $region34: #{tpu_custom_call.1} parent=0
    _
  %s6 = ssub.s32 1, %s4
  %s7 = scalar_select 0, %s6, %s4
  $region1: #{tpu_custom_call.1} parent=0
    #allocation2 [shape = 'u8[8192]{0}', space=vmem, size = 0x2000, scoped, tag = 'input window, operand 0, single buffered']
    #allocation3 [shape = 's32[1]{0}', space=sflag, size = 0x4, scoped, tag = 'scoped memory for tpu_custom_call.1']
    #allocation4 [shape = 's32[1]{0}', space=sflag, size = 0x4, scoped, tag = 'scoped memory for tpu_custom_call.1']
    #allocation5 [shape = 'u8[4096]{0}', space=vmem, size = 0x1000, scoped, tag = 'input window, operand 1, single buffered']
    #allocation6 [shape = 's32[1]{0}', space=sflag, size = 0x4, scoped, tag = 'scoped memory for tpu_custom_call.1']
    #allocation7 [shape = 'u8[4096]{0}', space=vmem, size = 0x1000, scoped, tag = 'input window, operand 2, single buffered']
    #allocation8 [shape = 'u8[8192]{0}', space=vmem, size = 0x2000, scoped, tag = 'output window, operand 0, single buffered']
    %8 = vsyncpa [#allocation3], 0
    %9 = vsyncpa [#allocation6], 0
    %10 = vsyncpa [#allocation4], 0
    // Predicated region
    $region2: #{tpu_custom_call.1} parent=1 // pred_check
      _
    $region3: #{tpu_custom_call.1} parent=1 // pred_check_branch
      %12 = sbr.rel (0) target = $region5
    $region4: #{tpu_custom_call.1} parent=1 // pred_region
      %s14 = ssub.s32 256, 256
      %15 = vsyncadd [#allocation3], %s14
      %s17 = sshll.u32 [#allocation2], 4
      %s18 = int_to_ptr.vmem [resolvable:$true] %s17
      %20 = dma.hbm_to_vmem [thread:$0]  %s0, 256, %s18, [#allocation3]
    $region5: #{tpu_custom_call.1} parent=1 // pred_fallthru
      _
    // Predicated region
    $region6: #{tpu_custom_call.1} parent=1 // pred_check
      _
    $region7: #{tpu_custom_call.1} parent=1 // pred_check_branch
      %22 = sbr.rel (0) target = $region9
    $region8: #{tpu_custom_call.1} parent=1 // pred_region
      %s24 = ssub.s32 128, 128
      %25 = vsyncadd [#allocation6], %s24
      %s27 = sshll.u32 [#allocation5], 4
      %s28 = int_to_ptr.vmem [resolvable:$true] %s27
      %30 = dma.hbm_to_vmem [thread:$0]  %s1, 128, %s28, [#allocation6]
    $region9: #{tpu_custom_call.1} parent=1 // pred_fallthru
      _
    // Predicated region
    $region10: #{tpu_custom_call.1} parent=1 // pred_check
      _
    $region11: #{tpu_custom_call.1} parent=1 // pred_check_branch
      %32 = sbr.rel (0) target = $region13
    $region12: #{tpu_custom_call.1} parent=1 // pred_region
      %s34 = ssub.s32 128, 128
      %35 = vsyncadd [#allocation6], %s34
      %s37 = sshll.u32 [#allocation7], 4
      %s38 = int_to_ptr.vmem [resolvable:$true] %s37
      %40 = dma.hbm_to_vmem [thread:$0]  %s2, 128, %s38, [#allocation6]
    $region13: #{tpu_custom_call.1} parent=1 // pred_fallthru
      _
    // Predicated region
    $region14: #{tpu_custom_call.1} parent=1 // pred_check
      _
    $region15: #{tpu_custom_call.1} parent=1 // pred_check_branch
      %42 = sbr.rel (0) target = $region17
    $region16: #{tpu_custom_call.1} parent=1 // pred_region
      %43 = dma.done [#allocation3], 256
    $region17: #{tpu_custom_call.1} parent=1 // pred_fallthru
      _
    // Predicated region
    $region18: #{tpu_custom_call.1} parent=1 // pred_check
      _
    $region19: #{tpu_custom_call.1} parent=1 // pred_check_branch
      %45 = sbr.rel (0) target = $region21
    $region20: #{tpu_custom_call.1} parent=1 // pred_region
      %46 = dma.done [#allocation6], 128
    $region21: #{tpu_custom_call.1} parent=1 // pred_fallthru
      _
    // Predicated region
    $region22: #{tpu_custom_call.1} parent=1 // pred_check
      _
    $region23: #{tpu_custom_call.1} parent=1 // pred_check_branch
      %48 = sbr.rel (0) target = $region25
    $region24: #{tpu_custom_call.1} parent=1 // pred_region
      %49 = dma.done [#allocation6], 128
    $region25: #{tpu_custom_call.1} parent=1 // pred_fallthru
      _
    %v50 = vld [vmem:[#allocation2] sm:$0xff]
    %v51 = vld [vmem:[#allocation2 + $0x8] sm:$0xff]
    %v52 = vld [vmem:[#allocation5] sm:$0xff]
    %54 = vset.pattern.permute.xlu0 0
    %55 = vperm.xlu0 %54, %v52
    %v56 = vpop.permute.xlu0 %55
    %v58 = vadd.f32 %v50, %v56
    %v59 = vadd.f32 %v51, %v56
    %v60 = vld [vmem:[#allocation7] sm:$0xff]
    %62 = vset.pattern.permute.xlu0 0
    %63 = vperm.xlu0 %62, %v60
    %v64 = vpop.permute.xlu0 %63
    %v66 = vmul.f32 %v58, %v64
    %v67 = vmul.f32 %v59, %v64
    %68 = vst [vmem:[#allocation8] sm:$0xff] %v66
    %69 = vst [vmem:[#allocation8 + $0x8] sm:$0xff] %v67
    // Predicated region
    $region26: #{tpu_custom_call.1} parent=1 // pred_check
      _
    $region27: #{tpu_custom_call.1} parent=1 // pred_check_branch
      %71 = sbr.rel (0) target = $region29
    $region28: #{tpu_custom_call.1} parent=1 // pred_region
      %s73 = ssub.s32 256, 256
      %74 = vsyncadd [#allocation4], %s73
      %s76 = sshll.u32 [#allocation8], 4
      %s77 = int_to_ptr.vmem [resolvable:$true] %s76
      %79 = dma.vmem_to_hbm [thread:$0]  %s77, 256, %s3, [#allocation4]
    $region29: #{tpu_custom_call.1} parent=1 // pred_fallthru
      _
    // Predicated region
    $region30: #{tpu_custom_call.1} parent=1 // pred_check
      _
    $region31: #{tpu_custom_call.1} parent=1 // pred_check_branch
      %81 = sbr.rel (0) target = $region33
    $region32: #{tpu_custom_call.1} parent=1 // pred_region
      %82 = dma.done [#allocation4], 256
    $region33: #{tpu_custom_call.1} parent=1 // pred_fallthru
      _
    %83 = vsyncpa [#allocation3], 1
    %84 = vsyncpa [#allocation6], 1
    %85 = vsyncpa [#allocation4], 1

</llo_original>
